<compile_context>
chip_gen: v5e
topology: v5e:2x2
jax: 0.10.0
libtpu: 0.0.40
codegen_flags: <defaults>
</compile_context>

<pallas_src>
import functools

import jax
import jax.numpy as jnp
from jax import lax
from jax.experimental import pallas as pl
from jax.experimental.pallas import tpu as pltpu

D = 768            # T5-base hidden size (hardcoded by the module's Linear(768, 1))
LANES = 128
NEG = -1.0e30      # finite stand-in for -inf (keeps online-softmax rescaling NaN-free)


def _emb_weighter_kernel(meta_ref,                     # SMEM (2,) i32: [hyp_len, n_total]
                         emb_ref, w_ref, scores_ref,   # VMEM tiles
                         out_ref,                      # VMEM (1, 1) f32
                         m_h, l_h, a_h,                # hyp online-softmax state (1,1) f32
                         m_r, l_r, a_r,                # ref online-softmax state (1,1) f32
                         *, tile_n):
    i = pl.program_id(0)
    rows = tile_n // LANES

    @pl.when(i == 0)
    def _init():
        m_h[...] = jnp.full_like(m_h, NEG)
        m_r[...] = jnp.full_like(m_r, NEG)
        l_h[...] = jnp.zeros_like(l_h)
        l_r[...] = jnp.zeros_like(l_r)
        a_h[...] = jnp.zeros_like(a_h)
        a_r[...] = jnp.zeros_like(a_r)

    hyp_len = meta_ref[0]
    n_total = meta_ref[1]

    emb = emb_ref[...].astype(jnp.float32)              # (tile_n, D), upcast per tile
    w = w_ref[...].astype(jnp.float32)                  # (1, D)
    scores = scores_ref[...][0]                          # (rows, LANES) f32, lane-dense

    # Linear(768 -> 1, bias=False): VPU multiply + lane reduce, then one relayout
    # of the per-token logits to a lane-dense (rows, 128) tile so the whole
    # mask/exp/sum pass runs on dense vregs instead of (tile_n, 1) columns.
    z_col = jnp.sum(emb * w, axis=-1, keepdims=True)     # (tile_n, 1)
    z = z_col.reshape(rows, LANES)                        # token t -> (t // 128, t % 128)

    # Global token index of each element of the dense tile; segment masks
    # (padding / out-of-range rows of the ragged last block excluded via n_total,
    #  so garbage rows of the unpadded embeddings stream are never used unmasked).
    idx = (i * tile_n
           + lax.broadcasted_iota(jnp.int32, (rows, LANES), 0) * LANES
           + lax.broadcasted_iota(jnp.int32, (rows, LANES), 1))
    hyp_mask = idx < hyp_len
    valid = idx < n_total
    ref_mask = jnp.logical_and(jnp.logical_not(hyp_mask), valid)

    # Online softmax over two disjoint segments, single fused exp pass.
    mh_new = jnp.maximum(
        m_h[...], jnp.max(jnp.where(hyp_mask, z, NEG), axis=(0, 1), keepdims=True))
    mr_new = jnp.maximum(
        m_r[...], jnp.max(jnp.where(ref_mask, z, NEG), axis=(0, 1), keepdims=True))

    m_row = jnp.where(hyp_mask, mh_new, mr_new)           # per-token reference max
    e = jnp.exp(jnp.where(valid, z - m_row, NEG))         # one exp; 0 for masked rows
    e_h = jnp.where(hyp_mask, e, 0.0)
    e_r = jnp.where(ref_mask, e, 0.0)

    c_h = jnp.exp(m_h[...] - mh_new)                       # rescale factors (<= 1)
    c_r = jnp.exp(m_r[...] - mr_new)

    l_h[...] = c_h * l_h[...] + jnp.sum(e_h, axis=(0, 1), keepdims=True)
    l_r[...] = c_r * l_r[...] + jnp.sum(e_r, axis=(0, 1), keepdims=True)
    a_h[...] = c_h * a_h[...] + jnp.sum(scores * e_h, axis=(0, 1), keepdims=True)
    a_r[...] = c_r * a_r[...] + jnp.sum(scores * e_r, axis=(0, 1), keepdims=True)
    m_h[...] = mh_new
    m_r[...] = mr_new

    @pl.when(i == pl.num_programs(0) - 1)
    def _finalize():
        # Guard the degenerate empty-segment case (PyTorch would produce NaN).
        hyp_score = jnp.where(l_h[...] > 0.0, a_h[...] / l_h[...], 0.0)
        ref_score = jnp.where(l_r[...] > 0.0, a_r[...] / l_r[...], 0.0)
        out_ref[...] = 0.5 * (hyp_score + ref_score)       # mean of the two scalars


def emb_weighter_forward(embeddings, weight, hyp_scores, ref_scores, *, tile_n=None):
    """embeddings: (N, 768) f32 or bf16 (streamed as-is, NOT padded or cast);
    weight: (1, 768) torch Linear layout; hyp_scores: (hyp_len,); ref_scores: (N - hyp_len,)."""
    n, d = embeddings.shape
    assert d == D, f"expected hidden size {D}, got {d}"
    hyp_len = int(hyp_scores.shape[0])

    if tile_n is None:
        tile_n = 2048 if embeddings.dtype == jnp.bfloat16 else 1024
    # Lane-dense path needs tile_n % 128 == 0; clamp to the 128-rounded token count
    # so small inputs don't DMA/compute a mostly-empty tile.
    n_up = ((n + LANES - 1) // LANES) * LANES
    tile_n = max(LANES, min((tile_n // LANES) * LANES, n_up))

    n_tiles = int(pl.cdiv(n, tile_n))
    rows = tile_n // LANES

    # Embeddings go in unpadded (the kernel masks the ragged last block and upcasts
    # in VMEM).  Scores are tiny: pad + reshape them to lane-dense (rows, 128) blocks.
    scores = jnp.concatenate([hyp_scores, ref_scores]).astype(jnp.float32)
    pad = n_tiles * tile_n - n
    scores_p = jnp.pad(scores, (0, pad)).reshape(n_tiles, rows, LANES)
    w_row = weight.reshape(1, d).astype(jnp.float32)
    meta = jnp.array([hyp_len, n], dtype=jnp.int32)         # runtime scalars (SMEM)

    kernel = functools.partial(_emb_weighter_kernel, tile_n=tile_n)

    grid_spec = pltpu.PrefetchScalarGridSpec(
        num_scalar_prefetch=1,
        grid=(n_tiles,),
        in_specs=[
            pl.BlockSpec((tile_n, d), lambda i, meta: (i, 0)),        # embeddings stream
            pl.BlockSpec((1, d), lambda i, meta: (0, 0)),             # linear weight row
            pl.BlockSpec((1, rows, LANES), lambda i, meta: (i, 0, 0)),  # lane-dense scores
        ],
        out_specs=pl.BlockSpec((1, 1), lambda i, meta: (0, 0)),       # resident accumulator
        scratch_shapes=[pltpu.VMEM((1, 1), jnp.float32)] * 6,
    )

    emb_bytes = int(embeddings.size) * embeddings.dtype.itemsize
    cost = pl.CostEstimate(
        flops=2 * n * d + 16 * n,
        transcendentals=n + 4 * n_tiles,
        bytes_accessed=emb_bytes + 4 * n_tiles * tile_n + 4 * d + 8 + 4,
    )

    out = pl.pallas_call(
        kernel,
        grid_spec=grid_spec,
        out_shape=jax.ShapeDtypeStruct((1, 1), jnp.float32),
        compiler_params=pltpu.CompilerParams(
            # Single reduction axis over tokens; a v7x-only 2-TensorCore split
            # (leading "parallel" axis + partial-state merge epilogue) is a
            # possible further step and intentionally not done here.
            dimension_semantics=("arbitrary",),
            vmem_limit_bytes=32 * 1024 * 1024,  # within the 64 MiB v7x ceiling
        ),
        cost_estimate=cost,
    )(meta, embeddings, w_row, scores_p)
    return out[0, 0]


def reference_forward(embeddings, weight, hyp_scores, ref_scores, hyp_len):
    z = embeddings.astype(jnp.float32) @ weight.astype(jnp.float32).T   # (N, 1)
    hyp_w = jax.nn.softmax(z[:hyp_len], axis=0)
    ref_w = jax.nn.softmax(z[hyp_len:], axis=0)
    hyp_score = hyp_scores @ hyp_w                                       # (1,)
    ref_score = ref_scores @ ref_w                                       # (1,)
    return jnp.mean(jnp.concatenate([hyp_score, ref_score]))


def _make_example(key, hyp_len, ref_len, emb_dtype):
    n = hyp_len + ref_len
    k_emb, k_w, k_hs, k_rs = jax.random.split(key, 4)
    embeddings = jax.random.normal(k_emb, (n, D), dtype=jnp.float32).astype(emb_dtype)
    bound = 1.0 / (D ** 0.5)                  # torch Linear(768,1,bias=False) init range
    weight = jax.random.uniform(k_w, (1, D), minval=-bound, maxval=bound, dtype=jnp.float32)
    hyp_scores = jax.random.uniform(k_hs, (hyp_len,), dtype=jnp.float32)
    ref_scores = jax.random.uniform(k_rs, (ref_len,), dtype=jnp.float32)
    return embeddings, weight, hyp_scores, ref_scores


if __name__ == "__main__":
    key = jax.random.PRNGKey(0)
    k1, k2, k3 = jax.random.split(key, 3)

    # Case 1: token counts taken from the module's word lists (hyp_len=5, ref_len=11).
    hyp_word_list = [[1, 2], [3], [4, 5]]
    ref_word_list = [[6, 7, 8], [9, 10], [11, 12, 13], [14, 15, 16]]
    hyp_len = sum(len(w) for w in hyp_word_list)   # 5
    ref_len = sum(len(w) for w in ref_word_list)   # 11
    emb, w, hs, rs = _make_example(k1, hyp_len, ref_len, jnp.float32)
    ref = reference_forward(emb, w, hs, rs, hyp_len)
    pred = jax.block_until_ready(emb_weighter_forward(emb, w, hs, rs))
    assert jnp.allclose(pred, ref, rtol=1e-5, atol=1e-5), (pred, ref)

    # Case 2: multi-tile online softmax with a mid-tile hyp/ref boundary and a
    # ragged (unpadded) last block — f32, small forced tile.
    emb, w, hs, rs = _make_example(k2, 150, 150, jnp.float32)
    ref = reference_forward(emb, w, hs, rs, 150)
    pred = jax.block_until_ready(emb_weighter_forward(emb, w, hs, rs, tile_n=128))
    assert jnp.allclose(pred, ref, rtol=1e-5, atol=1e-5), (pred, ref)

    # Case 3: bf16 embeddings end-to-end (HBM stream halved, per-tile upcast in VMEM).
    emb, w, hs, rs = _make_example(k3, 100, 200, jnp.bfloat16)
    ref = reference_forward(emb, w, hs, rs, 100)
    pred = jax.block_until_ready(emb_weighter_forward(emb, w, hs, rs))
    assert jnp.allclose(pred, ref, rtol=1e-4, atol=1e-4), (pred, ref)

    print("KERNEL_OK")
</pallas_src>

<mosaic_0001>
module attributes {stable_mosaic.version = 11 : i64} {
  func.func @_emb_weighter_kernel(%arg0: i32, %arg1: memref<2xi32, #tpu.memory_space<smem>>, %arg2: memref<128x768xf32, #tpu.memory_space<vmem>>, %arg3: memref<1x768xf32, #tpu.memory_space<vmem>>, %arg4: memref<1x1x128xf32, #tpu.memory_space<vmem>>, %arg5: memref<1x1xf32, #tpu.memory_space<vmem>>, %arg6: memref<1x1xf32, #tpu.memory_space<vmem>>, %arg7: memref<1x1xf32, #tpu.memory_space<vmem>>, %arg8: memref<1x1xf32, #tpu.memory_space<vmem>>, %arg9: memref<1x1xf32, #tpu.memory_space<vmem>>, %arg10: memref<1x1xf32, #tpu.memory_space<vmem>>, %arg11: memref<1x1xf32, #tpu.memory_space<vmem>>) attributes {dimension_semantics = [#tpu.dimension_semantics<arbitrary>], iteration_bounds = array<i64: 1>, scalar_prefetch = 1 : i64, scratch_operands = 6 : i64, tpu.core_type = #tpu.core_type<tc>, window_params = [{transform_indices = @transform_0, window_bounds = array<i64: 128, 768>}, {pipeline_mode = #tpu.pipeline_mode<synchronous>, transform_indices = @transform_1, window_bounds = array<i64: 1, 768>}, {transform_indices = @transform_2, window_bounds = array<i64: 1, 1, 128>}, {pipeline_mode = #tpu.pipeline_mode<synchronous>, transform_indices = @transform_3, window_bounds = array<i64: 1, 1>}]} {
    %c0_i32 = arith.constant 0 : i32
    %0 = arith.cmpi eq, %arg0, %c0_i32 : i32
    %1 = arith.extui %0 : i1 to i32
    %c0_i32_0 = arith.constant 0 : i32
    %2 = arith.cmpi ne, %1, %c0_i32_0 : i32
    scf.if %2 {
      %cst_51 = arith.constant -1.000000e+30 : f32
      %108 = vector.broadcast %cst_51 : f32 to vector<1x1xf32>
      %c0_52 = arith.constant 0 : index
      %c0_53 = arith.constant 0 : index
      %109 = vector.load %arg6[%c0_52, %c0_53] : memref<1x1xf32, #tpu.memory_space<vmem>>, vector<1x1xf32>
      tpu.vector_store %arg6[%c0_52, %c0_53], %108 {strides = array<i32>} : memref<1x1xf32, #tpu.memory_space<vmem>>, vector<1x1xf32>,
      %cst_54 = arith.constant -1.000000e+30 : f32
      %110 = vector.broadcast %cst_54 : f32 to vector<1x1xf32>
      %c0_55 = arith.constant 0 : index
      %c0_56 = arith.constant 0 : index
      %111 = vector.load %arg9[%c0_55, %c0_56] : memref<1x1xf32, #tpu.memory_space<vmem>>, vector<1x1xf32>
      tpu.vector_store %arg9[%c0_55, %c0_56], %110 {strides = array<i32>} : memref<1x1xf32, #tpu.memory_space<vmem>>, vector<1x1xf32>,
      %cst_57 = arith.constant 0.000000e+00 : f32
      %112 = vector.broadcast %cst_57 : f32 to vector<1x1xf32>
      %c0_58 = arith.constant 0 : index
      %c0_59 = arith.constant 0 : index
      %113 = vector.load %arg7[%c0_58, %c0_59] : memref<1x1xf32, #tpu.memory_space<vmem>>, vector<1x1xf32>
      tpu.vector_store %arg7[%c0_58, %c0_59], %112 {strides = array<i32>} : memref<1x1xf32, #tpu.memory_space<vmem>>, vector<1x1xf32>,
      %cst_60 = arith.constant 0.000000e+00 : f32
      %114 = vector.broadcast %cst_60 : f32 to vector<1x1xf32>
      %c0_61 = arith.constant 0 : index
      %c0_62 = arith.constant 0 : index
      %115 = vector.load %arg10[%c0_61, %c0_62] : memref<1x1xf32, #tpu.memory_space<vmem>>, vector<1x1xf32>
      tpu.vector_store %arg10[%c0_61, %c0_62], %114 {strides = array<i32>} : memref<1x1xf32, #tpu.memory_space<vmem>>, vector<1x1xf32>,
      %cst_63 = arith.constant 0.000000e+00 : f32
      %116 = vector.broadcast %cst_63 : f32 to vector<1x1xf32>
      %c0_64 = arith.constant 0 : index
      %c0_65 = arith.constant 0 : index
      %117 = vector.load %arg8[%c0_64, %c0_65] : memref<1x1xf32, #tpu.memory_space<vmem>>, vector<1x1xf32>
      tpu.vector_store %arg8[%c0_64, %c0_65], %116 {strides = array<i32>} : memref<1x1xf32, #tpu.memory_space<vmem>>, vector<1x1xf32>,
      %cst_66 = arith.constant 0.000000e+00 : f32
      %118 = vector.broadcast %cst_66 : f32 to vector<1x1xf32>
      %c0_67 = arith.constant 0 : index
      %c0_68 = arith.constant 0 : index
      %119 = vector.load %arg11[%c0_67, %c0_68] : memref<1x1xf32, #tpu.memory_space<vmem>>, vector<1x1xf32>
      tpu.vector_store %arg11[%c0_67, %c0_68], %118 {strides = array<i32>} : memref<1x1xf32, #tpu.memory_space<vmem>>, vector<1x1xf32>,
    } else {
    }
    %c0 = arith.constant 0 : index
    %3 = memref.load %arg1[%c0] : memref<2xi32, #tpu.memory_space<smem>>
    %c1 = arith.constant 1 : index
    %4 = memref.load %arg1[%c1] : memref<2xi32, #tpu.memory_space<smem>>
    %c0_1 = arith.constant 0 : index
    %c0_2 = arith.constant 0 : index
    %5 = vector.load %arg2[%c0_1, %c0_2] : memref<128x768xf32, #tpu.memory_space<vmem>>, vector<128x768xf32>
    %c0_3 = arith.constant 0 : index
    %c0_4 = arith.constant 0 : index
    %6 = vector.load %arg3[%c0_3, %c0_4] : memref<1x768xf32, #tpu.memory_space<vmem>>, vector<1x768xf32>
    %c0_5 = arith.constant 0 : index
    %c0_6 = arith.constant 0 : index
    %c0_7 = arith.constant 0 : index
    %7 = vector.load %arg4[%c0_5, %c0_6, %c0_7] : memref<1x1x128xf32, #tpu.memory_space<vmem>>, vector<1x1x128xf32>
    %8 = vector.shape_cast %7 : vector<1x1x128xf32> to vector<1x128xf32>
    %9 = vector.broadcast %6 : vector<1x768xf32> to vector<128x768xf32>
    %10 = arith.mulf %5, %9 : vector<128x768xf32>
    %cst = arith.constant dense<0.000000e+00> : vector<128xf32>
    %11 = vector.multi_reduction <add>, %10, %cst [1] : vector<128x768xf32> to vector<128xf32>
    %12 = vector.shape_cast %11 : vector<128xf32> to vector<128x1xf32>
    %13 = vector.shape_cast %12 : vector<128x1xf32> to vector<1x128xf32>
    %c128_i32 = arith.constant 128 : i32
    %14 = arith.muli %arg0, %c128_i32 : i32
    %15 = tpu.iota {dimensions = array<i32: 0>} : vector<1x128xi32>
    %c128_i32_8 = arith.constant 128 : i32
    %16 = vector.broadcast %c128_i32_8 : i32 to vector<1x128xi32>
    %17 = arith.muli %15, %16 : vector<1x128xi32>
    %18 = vector.broadcast %14 : i32 to vector<1x128xi32>
    %19 = arith.addi %18, %17 : vector<1x128xi32>
    %20 = tpu.iota {dimensions = array<i32: 1>} : vector<1x128xi32>
    %21 = arith.addi %19, %20 : vector<1x128xi32>
    %22 = vector.broadcast %3 : i32 to vector<1x128xi32>
    %23 = arith.cmpi slt, %21, %22 : vector<1x128xi32>
    %24 = vector.broadcast %4 : i32 to vector<1x128xi32>
    %25 = arith.cmpi slt, %21, %24 : vector<1x128xi32>
    %cst_9 = arith.constant dense<true> : vector<1x128xi1>
    %26 = arith.xori %23, %cst_9 : vector<1x128xi1>
    %27 = arith.andi %26, %25 : vector<1x128xi1>
    %c0_10 = arith.constant 0 : index
    %c0_11 = arith.constant 0 : index
    %28 = vector.load %arg6[%c0_10, %c0_11] : memref<1x1xf32, #tpu.memory_space<vmem>>, vector<1x1xf32>
    %cst_12 = arith.constant -1.000000e+30 : f32
    %29 = vector.broadcast %cst_12 : f32 to vector<1x128xf32>
    %30 = arith.select %23, %13, %29 : vector<1x128xi1>, vector<1x128xf32>
    %31 = vector.shape_cast %30 : vector<1x128xf32> to vector<1x1x128xf32>
    %cst_13 = arith.constant dense<0xFF800000> : vector<1xf32>
    %32 = vector.multi_reduction <maximumf>, %31, %cst_13 [1, 2] : vector<1x1x128xf32> to vector<1xf32>
    %33 = vector.shape_cast %32 : vector<1xf32> to vector<1x1x1xf32>
    %34 = vector.extract %33[0, 0, 0] : f32 from vector<1x1x1xf32>
    %35 = vector.broadcast %34 : f32 to vector<1x1xf32>
    %36 = arith.maximumf %28, %35 : vector<1x1xf32>
    %c0_14 = arith.constant 0 : index
    %c0_15 = arith.constant 0 : index
    %37 = vector.load %arg9[%c0_14, %c0_15] : memref<1x1xf32, #tpu.memory_space<vmem>>, vector<1x1xf32>
    %cst_16 = arith.constant -1.000000e+30 : f32
    %38 = vector.broadcast %cst_16 : f32 to vector<1x128xf32>
    %39 = arith.select %27, %13, %38 : vector<1x128xi1>, vector<1x128xf32>
    %40 = vector.shape_cast %39 : vector<1x128xf32> to vector<1x1x128xf32>
    %cst_17 = arith.constant dense<0xFF800000> : vector<1xf32>
    %41 = vector.multi_reduction <maximumf>, %40, %cst_17 [1, 2] : vector<1x1x128xf32> to vector<1xf32>
    %42 = vector.shape_cast %41 : vector<1xf32> to vector<1x1x1xf32>
    %43 = vector.extract %42[0, 0, 0] : f32 from vector<1x1x1xf32>
    %44 = vector.broadcast %43 : f32 to vector<1x1xf32>
    %45 = arith.maximumf %37, %44 : vector<1x1xf32>
    %46 = vector.shape_cast %36 : vector<1x1xf32> to vector<1x1xf32>
    %47 = vector.broadcast %46 : vector<1x1xf32> to vector<1x128xf32>
    %48 = vector.shape_cast %45 : vector<1x1xf32> to vector<1x1xf32>
    %49 = vector.broadcast %48 : vector<1x1xf32> to vector<1x128xf32>
    %50 = arith.select %23, %47, %49 : vector<1x128xi1>, vector<1x128xf32>
    %51 = arith.subf %13, %50 : vector<1x128xf32>
    %cst_18 = arith.constant -1.000000e+30 : f32
    %52 = vector.broadcast %cst_18 : f32 to vector<1x128xf32>
    %53 = arith.select %25, %51, %52 : vector<1x128xi1>, vector<1x128xf32>
    %54 = math.exp %53 : vector<1x128xf32>
    %cst_19 = arith.constant 0.000000e+00 : f32
    %55 = vector.broadcast %cst_19 : f32 to vector<1x128xf32>
    %56 = arith.select %23, %54, %55 : vector<1x128xi1>, vector<1x128xf32>
    %cst_20 = arith.constant 0.000000e+00 : f32
    %57 = vector.broadcast %cst_20 : f32 to vector<1x128xf32>
    %58 = arith.select %27, %54, %57 : vector<1x128xi1>, vector<1x128xf32>
    %c0_21 = arith.constant 0 : index
    %c0_22 = arith.constant 0 : index
    %59 = vector.load %arg6[%c0_21, %c0_22] : memref<1x1xf32, #tpu.memory_space<vmem>>, vector<1x1xf32>
    %60 = arith.subf %59, %36 : vector<1x1xf32>
    %61 = math.exp %60 : vector<1x1xf32>
    %c0_23 = arith.constant 0 : index
    %c0_24 = arith.constant 0 : index
    %62 = vector.load %arg9[%c0_23, %c0_24] : memref<1x1xf32, #tpu.memory_space<vmem>>, vector<1x1xf32>
    %63 = arith.subf %62, %45 : vector<1x1xf32>
    %64 = math.exp %63 : vector<1x1xf32>
    %c0_25 = arith.constant 0 : index
    %c0_26 = arith.constant 0 : index
    %65 = vector.load %arg7[%c0_25, %c0_26] : memref<1x1xf32, #tpu.memory_space<vmem>>, vector<1x1xf32>
    %66 = arith.mulf %61, %65 : vector<1x1xf32>
    %67 = vector.shape_cast %56 : vector<1x128xf32> to vector<1x1x128xf32>
    %cst_27 = arith.constant dense<0.000000e+00> : vector<1xf32>
    %68 = vector.multi_reduction <add>, %67, %cst_27 [1, 2] : vector<1x1x128xf32> to vector<1xf32>
    %69 = vector.shape_cast %68 : vector<1xf32> to vector<1x1x1xf32>
    %70 = vector.extract %69[0, 0, 0] : f32 from vector<1x1x1xf32>
    %71 = vector.broadcast %70 : f32 to vector<1x1xf32>
    %72 = arith.addf %66, %71 : vector<1x1xf32>
    %c0_28 = arith.constant 0 : index
    %c0_29 = arith.constant 0 : index
    %73 = vector.load %arg7[%c0_28, %c0_29] : memref<1x1xf32, #tpu.memory_space<vmem>>, vector<1x1xf32>
    tpu.vector_store %arg7[%c0_28, %c0_29], %72 {strides = array<i32>} : memref<1x1xf32, #tpu.memory_space<vmem>>, vector<1x1xf32>,
    %c0_30 = arith.constant 0 : index
    %c0_31 = arith.constant 0 : index
    %74 = vector.load %arg10[%c0_30, %c0_31] : memref<1x1xf32, #tpu.memory_space<vmem>>, vector<1x1xf32>
    %75 = arith.mulf %64, %74 : vector<1x1xf32>
    %76 = vector.shape_cast %58 : vector<1x128xf32> to vector<1x1x128xf32>
    %cst_32 = arith.constant dense<0.000000e+00> : vector<1xf32>
    %77 = vector.multi_reduction <add>, %76, %cst_32 [1, 2] : vector<1x1x128xf32> to vector<1xf32>
    %78 = vector.shape_cast %77 : vector<1xf32> to vector<1x1x1xf32>
    %79 = vector.extract %78[0, 0, 0] : f32 from vector<1x1x1xf32>
    %80 = vector.broadcast %79 : f32 to vector<1x1xf32>
    %81 = arith.addf %75, %80 : vector<1x1xf32>
    %c0_33 = arith.constant 0 : index
    %c0_34 = arith.constant 0 : index
    %82 = vector.load %arg10[%c0_33, %c0_34] : memref<1x1xf32, #tpu.memory_space<vmem>>, vector<1x1xf32>
    tpu.vector_store %arg10[%c0_33, %c0_34], %81 {strides = array<i32>} : memref<1x1xf32, #tpu.memory_space<vmem>>, vector<1x1xf32>,
    %c0_35 = arith.constant 0 : index
    %c0_36 = arith.constant 0 : index
    %83 = vector.load %arg8[%c0_35, %c0_36] : memref<1x1xf32, #tpu.memory_space<vmem>>, vector<1x1xf32>
    %84 = arith.mulf %61, %83 : vector<1x1xf32>
    %85 = arith.mulf %8, %56 : vector<1x128xf32>
    %86 = vector.shape_cast %85 : vector<1x128xf32> to vector<1x1x128xf32>
    %cst_37 = arith.constant dense<0.000000e+00> : vector<1xf32>
    %87 = vector.multi_reduction <add>, %86, %cst_37 [1, 2] : vector<1x1x128xf32> to vector<1xf32>
    %88 = vector.shape_cast %87 : vector<1xf32> to vector<1x1x1xf32>
    %89 = vector.extract %88[0, 0, 0] : f32 from vector<1x1x1xf32>
    %90 = vector.broadcast %89 : f32 to vector<1x1xf32>
    %91 = arith.addf %84, %90 : vector<1x1xf32>
    %c0_38 = arith.constant 0 : index
    %c0_39 = arith.constant 0 : index
    %92 = vector.load %arg8[%c0_38, %c0_39] : memref<1x1xf32, #tpu.memory_space<vmem>>, vector<1x1xf32>
    tpu.vector_store %arg8[%c0_38, %c0_39], %91 {strides = array<i32>} : memref<1x1xf32, #tpu.memory_space<vmem>>, vector<1x1xf32>,
    %c0_40 = arith.constant 0 : index
    %c0_41 = arith.constant 0 : index
    %93 = vector.load %arg11[%c0_40, %c0_41] : memref<1x1xf32, #tpu.memory_space<vmem>>, vector<1x1xf32>
    %94 = arith.mulf %64, %93 : vector<1x1xf32>
    %95 = arith.mulf %8, %58 : vector<1x128xf32>
    %96 = vector.shape_cast %95 : vector<1x128xf32> to vector<1x1x128xf32>
    %cst_42 = arith.constant dense<0.000000e+00> : vector<1xf32>
    %97 = vector.multi_reduction <add>, %96, %cst_42 [1, 2] : vector<1x1x128xf32> to vector<1xf32>
    %98 = vector.shape_cast %97 : vector<1xf32> to vector<1x1x1xf32>
    %99 = vector.extract %98[0, 0, 0] : f32 from vector<1x1x1xf32>
    %100 = vector.broadcast %99 : f32 to vector<1x1xf32>
    %101 = arith.addf %94, %100 : vector<1x1xf32>
    %c0_43 = arith.constant 0 : index
    %c0_44 = arith.constant 0 : index
    %102 = vector.load %arg11[%c0_43, %c0_44] : memref<1x1xf32, #tpu.memory_space<vmem>>, vector<1x1xf32>
    tpu.vector_store %arg11[%c0_43, %c0_44], %101 {strides = array<i32>} : memref<1x1xf32, #tpu.memory_space<vmem>>, vector<1x1xf32>,
    %c0_45 = arith.constant 0 : index
    %c0_46 = arith.constant 0 : index
    %103 = vector.load %arg6[%c0_45, %c0_46] : memref<1x1xf32, #tpu.memory_space<vmem>>, vector<1x1xf32>
    tpu.vector_store %arg6[%c0_45, %c0_46], %36 {strides = array<i32>} : memref<1x1xf32, #tpu.memory_space<vmem>>, vector<1x1xf32>,
    %c0_47 = arith.constant 0 : index
    %c0_48 = arith.constant 0 : index
    %104 = vector.load %arg9[%c0_47, %c0_48] : memref<1x1xf32, #tpu.memory_space<vmem>>, vector<1x1xf32>
    tpu.vector_store %arg9[%c0_47, %c0_48], %45 {strides = array<i32>} : memref<1x1xf32, #tpu.memory_space<vmem>>, vector<1x1xf32>,
    %c0_i32_49 = arith.constant 0 : i32
    %105 = arith.cmpi eq, %arg0, %c0_i32_49 : i32
    %106 = arith.extui %105 : i1 to i32
    %c0_i32_50 = arith.constant 0 : i32
    %107 = arith.cmpi ne, %106, %c0_i32_50 : i32
    scf.if %107 {
      %c0_51 = arith.constant 0 : index
      %c0_52 = arith.constant 0 : index
      %108 = vector.load %arg7[%c0_51, %c0_52] : memref<1x1xf32, #tpu.memory_space<vmem>>, vector<1x1xf32>
      %cst_53 = arith.constant 0.000000e+00 : f32
      %109 = vector.broadcast %cst_53 : f32 to vector<1x1xf32>
      %110 = arith.cmpf ogt, %108, %109 : vector<1x1xf32>
      %c0_54 = arith.constant 0 : index
      %c0_55 = arith.constant 0 : index
      %111 = vector.load %arg8[%c0_54, %c0_55] : memref<1x1xf32, #tpu.memory_space<vmem>>, vector<1x1xf32>
      %c0_56 = arith.constant 0 : index
      %c0_57 = arith.constant 0 : index
      %112 = vector.load %arg7[%c0_56, %c0_57] : memref<1x1xf32, #tpu.memory_space<vmem>>, vector<1x1xf32>
      %113 = arith.divf %111, %112 : vector<1x1xf32>
      %cst_58 = arith.constant 0.000000e+00 : f32
      %114 = vector.broadcast %cst_58 : f32 to vector<1x1xf32>
      %115 = arith.select %110, %113, %114 : vector<1x1xi1>, vector<1x1xf32>
      %c0_59 = arith.constant 0 : index
      %c0_60 = arith.constant 0 : index
      %116 = vector.load %arg10[%c0_59, %c0_60] : memref<1x1xf32, #tpu.memory_space<vmem>>, vector<1x1xf32>
      %cst_61 = arith.constant 0.000000e+00 : f32
      %117 = vector.broadcast %cst_61 : f32 to vector<1x1xf32>
      %118 = arith.cmpf ogt, %116, %117 : vector<1x1xf32>
      %c0_62 = arith.constant 0 : index
      %c0_63 = arith.constant 0 : index
      %119 = vector.load %arg11[%c0_62, %c0_63] : memref<1x1xf32, #tpu.memory_space<vmem>>, vector<1x1xf32>
      %c0_64 = arith.constant 0 : index
      %c0_65 = arith.constant 0 : index
      %120 = vector.load %arg10[%c0_64, %c0_65] : memref<1x1xf32, #tpu.memory_space<vmem>>, vector<1x1xf32>
      %121 = arith.divf %119, %120 : vector<1x1xf32>
      %cst_66 = arith.constant 0.000000e+00 : f32
      %122 = vector.broadcast %cst_66 : f32 to vector<1x1xf32>
      %123 = arith.select %118, %121, %122 : vector<1x1xi1>, vector<1x1xf32>
      %124 = arith.addf %115, %123 : vector<1x1xf32>
      %cst_67 = arith.constant 5.000000e-01 : f32
      %125 = vector.broadcast %cst_67 : f32 to vector<1x1xf32>
      %126 = arith.mulf %125, %124 : vector<1x1xf32>
      %c0_68 = arith.constant 0 : index
      %c0_69 = arith.constant 0 : index
      %127 = vector.load %arg5[%c0_68, %c0_69] : memref<1x1xf32, #tpu.memory_space<vmem>>, vector<1x1xf32>
      tpu.vector_store %arg5[%c0_68, %c0_69], %126 {strides = array<i32>} : memref<1x1xf32, #tpu.memory_space<vmem>>, vector<1x1xf32>,
    } else {
    }
    return
  }
  func.func @transform_0(%arg0: i32, %arg1: memref<2xi32, #tpu.memory_space<smem>>) -> (i32, i32) {
    %c0_i32 = arith.constant 0 : i32
    %c0_i32_0 = arith.constant 0 : i32
    return %arg0, %c0_i32 : i32, i32
  }
  func.func @transform_1(%arg0: i32, %arg1: memref<2xi32, #tpu.memory_space<smem>>) -> (i32, i32) {
    %c0_i32 = arith.constant 0 : i32
    %c0_i32_0 = arith.constant 0 : i32
    %c0_i32_1 = arith.constant 0 : i32
    return %c0_i32, %c0_i32_0 : i32, i32
  }
  func.func @transform_2(%arg0: i32, %arg1: memref<2xi32, #tpu.memory_space<smem>>) -> (i32, i32, i32) {
    %c0_i32 = arith.constant 0 : i32
    %c0_i32_0 = arith.constant 0 : i32
    %c0_i32_1 = arith.constant 0 : i32
    return %arg0, %c0_i32, %c0_i32_0 : i32, i32, i32
  }
  func.func @transform_3(%arg0: i32, %arg1: memref<2xi32, #tpu.memory_space<smem>>) -> (i32, i32) {
    %c0_i32 = arith.constant 0 : i32
    %c0_i32_0 = arith.constant 0 : i32
    %c0_i32_1 = arith.constant 0 : i32
    return %c0_i32, %c0_i32_0 : i32, i32
  }
}

</mosaic_0001>

<llo_original>
// kernel: tpu_custom_call.1
$region0: #{tpu_custom_call.1}
  #allocation0 [shape = 'u32[]', space=smem, size = 0x4, offset = 0x4, fixed_abs, tag = 'smem constant byte address 0x4 - core index']
  #allocation1 [shape = 'u32[72,128]{1,0:T(1,128)}', space=vmem, size = 0x9000, scoped, tag = 'internal scratch']
  #allocation2 [shape = 'f32[1,1]{1,0:T(1,128)}', space=vmem, size = 0x200, scoped, tag = 'scratch operand']
  #allocation3 [shape = 'f32[1,1]{1,0:T(1,128)}', space=vmem, size = 0x200, scoped, tag = 'scratch operand']
  #allocation4 [shape = 'f32[1,1]{1,0:T(1,128)}', space=vmem, size = 0x200, scoped, tag = 'scratch operand']
  #allocation5 [shape = 'f32[1,1]{1,0:T(1,128)}', space=vmem, size = 0x200, scoped, tag = 'scratch operand']
  #allocation6 [shape = 'f32[1,1]{1,0:T(1,128)}', space=vmem, size = 0x200, scoped, tag = 'scratch operand']
  #allocation7 [shape = 'f32[1,1]{1,0:T(1,128)}', space=vmem, size = 0x200, scoped, tag = 'scratch operand']
  #allocation8 [shape = 's32[1]{0}', space=sflag, size = 0x4, scoped, tag = 'scoped memory for tpu_custom_call.1']
  #allocation9 [shape = 'u8[512]{0}', space=smem, size = 0x200, scoped, tag = 'prefetched SMEM operand 0']
  %s0 = inlined_call_operand.hbm [shape: s32[2], index: 0, kind: input, shape index: {}]
  %s1 = inlined_call_operand.hbm [shape: f32[16,768], index: 1, kind: input, shape index: {}]
  %s2 = inlined_call_operand.hbm [shape: f32[1,768], index: 2, kind: input, shape index: {}]
  %s3 = inlined_call_operand.vmem [shape: f32[1,1,128], index: 3, kind: input, shape index: {}]
  %s4 = inlined_call_operand.hbm [shape: f32[1,1], index: 4, kind: output, shape index: {}]
  %s5 = sld [smem:[#allocation0]]
  $region38: #{tpu_custom_call.1} parent=0
    _
  %s7 = ssub.s32 1, %s5
  %s8 = scalar_select 0, %s7, %s5
  %s10 = sshll.u32 %s0, 4
  %s11 = int_to_ptr.hbm [resolvable:$true] %s10
  %13 = dma.hbm_to_smem %s11, 16, [#allocation9], [#allocation8]
  %15 = dma.done [#allocation8], 16
  %16 = sfence
  $region1: #{tpu_custom_call.1} parent=0
    #allocation10 [shape = 'u8[393216]{0}', space=vmem, size = 0x60000, scoped, tag = 'input window, operand 1, single buffered']
    #allocation11 [shape = 's32[1]{0}', space=sflag, size = 0x4, scoped, tag = 'scoped memory for tpu_custom_call.1']
    #allocation12 [shape = 's32[1]{0}', space=sflag, size = 0x4, scoped, tag = 'scoped memory for tpu_custom_call.1']
    #allocation13 [shape = 'u8[3072]{0}', space=vmem, size = 0xc00, scoped, tag = 'input window, operand 2, single buffered']
    #allocation14 [shape = 's32[1]{0}', space=sflag, size = 0x4, scoped, tag = 'scoped memory for tpu_custom_call.1']
    #allocation15 [shape = 'u8[512]{0}', space=vmem, size = 0x400, scoped, tag = 'output window, operand 0, single buffered']
    %17 = vsyncpa [#allocation11], 0
    %18 = vsyncpa [#allocation14], 0
    %19 = vsyncpa [#allocation12], 0
    // Predicated region
    $region2: #{tpu_custom_call.1} parent=1 // pred_check
      _
    $region3: #{tpu_custom_call.1} parent=1 // pred_check_branch
      %21 = sbr.rel (0) target = $region5
    $region4: #{tpu_custom_call.1} parent=1 // pred_region
      %23 = vsyncadd [#allocation11], 10752
      %s24 = sshll.u32 %s1, 4
      %s25 = int_to_ptr.hbm [resolvable:$true] %s24
      %s26 = sshll.u32 [#allocation10], 4
      %s27 = int_to_ptr.vmem [resolvable:$true] %s26
      %32 = dma.hbm_to_vmem [thread:$0]  %s25, 1536, %s27, [#allocation11], 768, 768, 48
    $region5: #{tpu_custom_call.1} parent=1 // pred_fallthru
      _
    // Predicated region
    $region6: #{tpu_custom_call.1} parent=1 // pred_check
      _
    $region7: #{tpu_custom_call.1} parent=1 // pred_check_branch
      %34 = sbr.rel (0) target = $region9
    $region8: #{tpu_custom_call.1} parent=1 // pred_region
      %36 = vsyncadd [#allocation14], 0
      %s38 = sshll.u32 %s2, 4
      %s39 = int_to_ptr.hbm [resolvable:$true] %s38
      %s40 = sshll.u32 [#allocation13], 4
      %s41 = int_to_ptr.vmem [resolvable:$true] %s40
      %43 = dma.hbm_to_vmem [thread:$0]  %s39, 96, %s41, [#allocation14]
    $region9: #{tpu_custom_call.1} parent=1 // pred_fallthru
      _
    // Predicated region
    $region10: #{tpu_custom_call.1} parent=1 // pred_check
      _
    $region11: #{tpu_custom_call.1} parent=1 // pred_check_branch
      %45 = sbr.rel (0) target = $region13
    $region12: #{tpu_custom_call.1} parent=1 // pred_region
      _
    $region13: #{tpu_custom_call.1} parent=1 // pred_fallthru
      _
    // Predicated region
    $region14: #{tpu_custom_call.1} parent=1 // pred_check
      _
    $region15: #{tpu_custom_call.1} parent=1 // pred_check_branch
      %47 = sbr.rel (0) target = $region17
    $region16: #{tpu_custom_call.1} parent=1 // pred_region
      %49 = dma.done [#allocation11], 12288
    $region17: #{tpu_custom_call.1} parent=1 // pred_fallthru
      _
    // Predicated region
    $region18: #{tpu_custom_call.1} parent=1 // pred_check
      _
    $region19: #{tpu_custom_call.1} parent=1 // pred_check_branch
      %51 = sbr.rel (0) target = $region21
    $region20: #{tpu_custom_call.1} parent=1 // pred_region
      %53 = dma.done [#allocation14], 96
    $region21: #{tpu_custom_call.1} parent=1 // pred_fallthru
      _
    %p54 = scmp.eq.s32.totalorder 0, 0
    // Predicated region
    $region22: #{tpu_custom_call.1} parent=1 // pred_check
      %p55 = pneg %p54
    $region23: #{tpu_custom_call.1} parent=1 // pred_check_branch
      %57 = sbr.rel (%p55) target = $region25
    $region24: #{tpu_custom_call.1} parent=1 // pred_region
      %vm58 = vcmask 0
      %59 = vst.msk [vmem:[#allocation2] sm:$0x1] %vm58, -1e+30
      %60 = vst.msk [vmem:[#allocation5] sm:$0x1] %vm58, -1e+30
      %61 = vst.msk [vmem:[#allocation3] sm:$0x1] %vm58, 0.0
      %62 = vst.msk [vmem:[#allocation6] sm:$0x1] %vm58, 0.0
      %63 = vst.msk [vmem:[#allocation4] sm:$0x1] %vm58, 0.0
      %64 = vst.msk [vmem:[#allocation7] sm:$0x1] %vm58, 0.0
    $region25: #{tpu_custom_call.1} parent=1 // pred_fallthru
      _
    %s65 = sld [smem:[#allocation9]]
    %s66 = sld [smem:[#allocation9 + $0x1]]
    %v67 = vld [vmem:[#allocation10] sm:$0xff]
    %v68 = vld [vmem:[#allocation10 + $0x8] sm:$0xff]
    %v69 = vld [vmem:[#allocation10 + $0x10] sm:$0xff]
    %v70 = vld [vmem:[#allocation10 + $0x18] sm:$0xff]
    %v71 = vld [vmem:[#allocation10 + $0x20] sm:$0xff]
    %v72 = vld [vmem:[#allocation10 + $0x28] sm:$0xff]
    %v73 = vld [vmem:[#allocation10 + $0x30] sm:$0xff]
    %v74 = vld [vmem:[#allocation10 + $0x38] sm:$0xff]
    %v75 = vld [vmem:[#allocation10 + $0x40] sm:$0xff]
    %v76 = vld [vmem:[#allocation10 + $0x48] sm:$0xff]
    %v77 = vld [vmem:[#allocation10 + $0x50] sm:$0xff]
    %v78 = vld [vmem:[#allocation10 + $0x58] sm:$0xff]
    %v79 = vld [vmem:[#allocation10 + $0x60] sm:$0xff]
    %v80 = vld [vmem:[#allocation10 + $0x68] sm:$0xff]
    %v81 = vld [vmem:[#allocation10 + $0x70] sm:$0xff]
    %v82 = vld [vmem:[#allocation10 + $0x78] sm:$0xff]
    %v83 = vld [vmem:[#allocation10 + $0x80] sm:$0xff]
    %v84 = vld [vmem:[#allocation10 + $0x88] sm:$0xff]
    %v85 = vld [vmem:[#allocation10 + $0x90] sm:$0xff]
    %v86 = vld [vmem:[#allocation10 + $0x98] sm:$0xff]
    %v87 = vld [vmem:[#allocation10 + $0xa0] sm:$0xff]
    %v88 = vld [vmem:[#allocation10 + $0xa8] sm:$0xff]
    %v89 = vld [vmem:[#allocation10 + $0xb0] sm:$0xff]
    %v90 = vld [vmem:[#allocation10 + $0xb8] sm:$0xff]
    %v91 = vld [vmem:[#allocation10 + $0xc0] sm:$0xff]
    %v92 = vld [vmem:[#allocation10 + $0xc8] sm:$0xff]
    %v93 = vld [vmem:[#allocation10 + $0xd0] sm:$0xff]
    %v94 = vld [vmem:[#allocation10 + $0xd8] sm:$0xff]
    %v95 = vld [vmem:[#allocation10 + $0xe0] sm:$0xff]
    %v96 = vld [vmem:[#allocation10 + $0xe8] sm:$0xff]
    %v97 = vld [vmem:[#allocation10 + $0xf0] sm:$0xff]
    %v98 = vld [vmem:[#allocation10 + $0xf8] sm:$0xff]
    %v99 = vld [vmem:[#allocation10 + $0x100] sm:$0xff]
    %v100 = vld [vmem:[#allocation10 + $0x108] sm:$0xff]
    %v101 = vld [vmem:[#allocation10 + $0x110] sm:$0xff]
    %v102 = vld [vmem:[#allocation10 + $0x118] sm:$0xff]
    %v103 = vld [vmem:[#allocation10 + $0x120] sm:$0xff]
    %v104 = vld [vmem:[#allocation10 + $0x128] sm:$0xff]
    %v105 = vld [vmem:[#allocation10 + $0x130] sm:$0xff]
    %v106 = vld [vmem:[#allocation10 + $0x138] sm:$0xff]
    %v107 = vld [vmem:[#allocation10 + $0x140] sm:$0xff]
    %v108 = vld [vmem:[#allocation10 + $0x148] sm:$0xff]
    %v109 = vld [vmem:[#allocation10 + $0x150] sm:$0xff]
    %v110 = vld [vmem:[#allocation10 + $0x158] sm:$0xff]
    %v111 = vld [vmem:[#allocation10 + $0x160] sm:$0xff]
    %v112 = vld [vmem:[#allocation10 + $0x168] sm:$0xff]
    %v113 = vld [vmem:[#allocation10 + $0x170] sm:$0xff]
    %v114 = vld [vmem:[#allocation10 + $0x178] sm:$0xff]
    %v115 = vld [vmem:[#allocation10 + $0x180] sm:$0xff]
    %v116 = vld [vmem:[#allocation10 + $0x188] sm:$0xff]
    %v117 = vld [vmem:[#allocation10 + $0x190] sm:$0xff]
    %v118 = vld [vmem:[#allocation10 + $0x198] sm:$0xff]
    %v119 = vld [vmem:[#allocation10 + $0x1a0] sm:$0xff]
    %v120 = vld [vmem:[#allocation10 + $0x1a8] sm:$0xff]
    %v121 = vld [vmem:[#allocation10 + $0x1b0] sm:$0xff]
    %v122 = vld [vmem:[#allocation10 + $0x1b8] sm:$0xff]
    %v123 = vld [vmem:[#allocation10 + $0x1c0] sm:$0xff]
    %v124 = vld [vmem:[#allocation10 + $0x1c8] sm:$0xff]
    %v125 = vld [vmem:[#allocation10 + $0x1d0] sm:$0xff]
    %v126 = vld [vmem:[#allocation10 + $0x1d8] sm:$0xff]
    %v127 = vld [vmem:[#allocation10 + $0x1e0] sm:$0xff]
    %v128 = vld [vmem:[#allocation10 + $0x1e8] sm:$0xff]
    %v129 = vld [vmem:[#allocation10 + $0x1f0] sm:$0xff]
    %v130 = vld [vmem:[#allocation10 + $0x1f8] sm:$0xff]
    %v131 = vld [vmem:[#allocation10 + $0x200] sm:$0xff]
    %v132 = vld [vmem:[#allocation10 + $0x208] sm:$0xff]
    %v133 = vld [vmem:[#allocation10 + $0x210] sm:$0xff]
    %v134 = vld [vmem:[#allocation10 + $0x218] sm:$0xff]
    %v135 = vld [vmem:[#allocation10 + $0x220] sm:$0xff]
    %v136 = vld [vmem:[#allocation10 + $0x228] sm:$0xff]
    %v137 = vld [vmem:[#allocation10 + $0x230] sm:$0xff]
    %v138 = vld [vmem:[#allocation10 + $0x238] sm:$0xff]
    %v139 = vld [vmem:[#allocation10 + $0x240] sm:$0xff]
    %v140 = vld [vmem:[#allocation10 + $0x248] sm:$0xff]
    %v141 = vld [vmem:[#allocation10 + $0x250] sm:$0xff]
    %v142 = vld [vmem:[#allocation10 + $0x258] sm:$0xff]
    %v143 = vld [vmem:[#allocation10 + $0x260] sm:$0xff]
    %v144 = vld [vmem:[#allocation10 + $0x268] sm:$0xff]
    %v145 = vld [vmem:[#allocation10 + $0x270] sm:$0xff]
    %v146 = vld [vmem:[#allocation10 + $0x278] sm:$0xff]
    %v147 = vld [vmem:[#allocation10 + $0x280] sm:$0xff]
    %v148 = vld [vmem:[#allocation10 + $0x288] sm:$0xff]
    %v149 = vld [vmem:[#allocation10 + $0x290] sm:$0xff]
    %v150 = vld [vmem:[#allocation10 + $0x298] sm:$0xff]
    %v151 = vld [vmem:[#allocation10 + $0x2a0] sm:$0xff]
    %v152 = vld [vmem:[#allocation10 + $0x2a8] sm:$0xff]
    %v153 = vld [vmem:[#allocation10 + $0x2b0] sm:$0xff]
    %v154 = vld [vmem:[#allocation10 + $0x2b8] sm:$0xff]
    %v155 = vld [vmem:[#allocation10 + $0x2c0] sm:$0xff]
    %v156 = vld [vmem:[#allocation10 + $0x2c8] sm:$0xff]
    %v157 = vld [vmem:[#allocation10 + $0x2d0] sm:$0xff]
    %v158 = vld [vmem:[#allocation10 + $0x2d8] sm:$0xff]
    %v159 = vld [vmem:[#allocation10 + $0x2e0] sm:$0xff]
    %v160 = vld [vmem:[#allocation10 + $0x2e8] sm:$0xff]
    %v161 = vld [vmem:[#allocation10 + $0x2f0] sm:$0xff]
    %v162 = vld [vmem:[#allocation10 + $0x2f8] sm:$0xff]
    %v163 = vld [vmem:[#allocation13] sm:$0x3f]
    %v164 = vld [vmem:[%s3] sm:$0x1]
    %v166 = vperm.slane %v163, 0
    %v167 = vperm.slane %v163, 1
    %v168 = vperm.slane %v163, 2
    %v169 = vperm.slane %v163, 3
    %v170 = vperm.slane %v163, 4
    %v171 = vperm.slane %v163, 5
    %v178 = vmul.f32 %v67, %v166
    %v179 = vmul.f32 %v68, %v167
    %v180 = vmul.f32 %v69, %v168
    %v181 = vmul.f32 %v70, %v169
    %v182 = vmul.f32 %v71, %v170
    %v183 = vmul.f32 %v72, %v171
    %v184 = vmul.f32 %v73, %v166
    %v185 = vmul.f32 %v74, %v167
    %v186 = vmul.f32 %v75, %v168
    %v187 = vmul.f32 %v76, %v169
    %v188 = vmul.f32 %v77, %v170
    %v189 = vmul.f32 %v78, %v171
    %v190 = vmul.f32 %v79, %v166
    %v191 = vmul.f32 %v80, %v167
    %v192 = vmul.f32 %v81, %v168
    %v193 = vmul.f32 %v82, %v169
    %v194 = vmul.f32 %v83, %v170
    %v195 = vmul.f32 %v84, %v171
    %v196 = vmul.f32 %v85, %v166
    %v197 = vmul.f32 %v86, %v167
    %v198 = vmul.f32 %v87, %v168
    %v199 = vmul.f32 %v88, %v169
    %v200 = vmul.f32 %v89, %v170
    %v201 = vmul.f32 %v90, %v171
    %v202 = vmul.f32 %v91, %v166
    %v203 = vmul.f32 %v92, %v167
    %v204 = vmul.f32 %v93, %v168
    %v205 = vmul.f32 %v94, %v169
    %v206 = vmul.f32 %v95, %v170
    %v207 = vmul.f32 %v96, %v171
    %v208 = vmul.f32 %v97, %v166
    %v209 = vmul.f32 %v98, %v167
    %v210 = vmul.f32 %v99, %v168
    %v211 = vmul.f32 %v100, %v169
    %v212 = vmul.f32 %v101, %v170
    %v213 = vmul.f32 %v102, %v171
    %v214 = vmul.f32 %v103, %v166
    %v215 = vmul.f32 %v104, %v167
    %v216 = vmul.f32 %v105, %v168
    %v217 = vmul.f32 %v106, %v169
    %v218 = vmul.f32 %v107, %v170
    %v219 = vmul.f32 %v108, %v171
    %v220 = vmul.f32 %v109, %v166
    %v221 = vmul.f32 %v110, %v167
    %v222 = vmul.f32 %v111, %v168
    %v223 = vmul.f32 %v112, %v169
    %v224 = vmul.f32 %v113, %v170
    %v225 = vmul.f32 %v114, %v171
    %v226 = vmul.f32 %v115, %v166
    %v227 = vmul.f32 %v116, %v167
    %v228 = vmul.f32 %v117, %v168
    %v229 = vmul.f32 %v118, %v169
    %v230 = vmul.f32 %v119, %v170
    %v231 = vmul.f32 %v120, %v171
    %v232 = vmul.f32 %v121, %v166
    %v233 = vmul.f32 %v122, %v167
    %v234 = vmul.f32 %v123, %v168
    %v235 = vmul.f32 %v124, %v169
    %v236 = vmul.f32 %v125, %v170
    %v237 = vmul.f32 %v126, %v171
    %v238 = vmul.f32 %v127, %v166
    %v239 = vmul.f32 %v128, %v167
    %v240 = vmul.f32 %v129, %v168
    %v241 = vmul.f32 %v130, %v169
    %v242 = vmul.f32 %v131, %v170
    %v243 = vmul.f32 %v132, %v171
    %v244 = vmul.f32 %v133, %v166
    %v245 = vmul.f32 %v134, %v167
    %v246 = vmul.f32 %v135, %v168
    %v247 = vmul.f32 %v136, %v169
    %v248 = vmul.f32 %v137, %v170
    %v249 = vmul.f32 %v138, %v171
    %v250 = vmul.f32 %v139, %v166
    %v251 = vmul.f32 %v140, %v167
    %v252 = vmul.f32 %v141, %v168
    %v253 = vmul.f32 %v142, %v169
    %v254 = vmul.f32 %v143, %v170
    %v255 = vmul.f32 %v144, %v171
    %v256 = vmul.f32 %v145, %v166
    %v257 = vmul.f32 %v146, %v167
    %v258 = vmul.f32 %v147, %v168
    %v259 = vmul.f32 %v148, %v169
    %v260 = vmul.f32 %v149, %v170
    %v261 = vmul.f32 %v150, %v171
    %v262 = vmul.f32 %v151, %v166
    %v263 = vmul.f32 %v152, %v167
    %v264 = vmul.f32 %v153, %v168
    %v265 = vmul.f32 %v154, %v169
    %v266 = vmul.f32 %v155, %v170
    %v267 = vmul.f32 %v156, %v171
    %v268 = vmul.f32 %v157, %v166
    %v269 = vmul.f32 %v158, %v167
    %v270 = vmul.f32 %v159, %v168
    %v271 = vmul.f32 %v160, %v169
    %v272 = vmul.f32 %v161, %v170
    %v273 = vmul.f32 %v162, %v171
    %v274 = vadd.f32 %v178, %v179
    %v275 = vadd.f32 %v274, %v180
    %v276 = vadd.f32 %v275, %v181
    %v277 = vadd.f32 %v276, %v182
    %v278 = vadd.f32 %v277, %v183
    %279 = vadd.xlane.f32.xlu0 %v278
    %v280 = vpop.xlane.xlu0 %279
    %v281 = vadd.f32 %v184, %v185
    %v282 = vadd.f32 %v281, %v186
    %v283 = vadd.f32 %v282, %v187
    %v284 = vadd.f32 %v283, %v188
    %v285 = vadd.f32 %v284, %v189
    %286 = vadd.xlane.f32.xlu0 %v285
    %v287 = vpop.xlane.xlu0 %286
    %v288 = vadd.f32 %v190, %v191
    %v289 = vadd.f32 %v288, %v192
    %v290 = vadd.f32 %v289, %v193
    %v291 = vadd.f32 %v290, %v194
    %v292 = vadd.f32 %v291, %v195
    %293 = vadd.xlane.f32.xlu0 %v292
    %v294 = vpop.xlane.xlu0 %293
    %v295 = vadd.f32 %v196, %v197
    %v296 = vadd.f32 %v295, %v198
    %v297 = vadd.f32 %v296, %v199
    %v298 = vadd.f32 %v297, %v200
    %v299 = vadd.f32 %v298, %v201
    %300 = vadd.xlane.f32.xlu0 %v299
    %v301 = vpop.xlane.xlu0 %300
    %v302 = vadd.f32 %v202, %v203
    %v303 = vadd.f32 %v302, %v204
    %v304 = vadd.f32 %v303, %v205
    %v305 = vadd.f32 %v304, %v206
    %v306 = vadd.f32 %v305, %v207
    %307 = vadd.xlane.f32.xlu0 %v306
    %v308 = vpop.xlane.xlu0 %307
    %v309 = vadd.f32 %v208, %v209
    %v310 = vadd.f32 %v309, %v210
    %v311 = vadd.f32 %v310, %v211
    %v312 = vadd.f32 %v311, %v212
    %v313 = vadd.f32 %v312, %v213
    %314 = vadd.xlane.f32.xlu0 %v313
    %v315 = vpop.xlane.xlu0 %314
    %v316 = vadd.f32 %v214, %v215
    %v317 = vadd.f32 %v316, %v216
    %v318 = vadd.f32 %v317, %v217
    %v319 = vadd.f32 %v318, %v218
    %v320 = vadd.f32 %v319, %v219
    %321 = vadd.xlane.f32.xlu0 %v320
    %v322 = vpop.xlane.xlu0 %321
    %v323 = vadd.f32 %v220, %v221
    %v324 = vadd.f32 %v323, %v222
    %v325 = vadd.f32 %v324, %v223
    %v326 = vadd.f32 %v325, %v224
    %v327 = vadd.f32 %v326, %v225
    %328 = vadd.xlane.f32.xlu0 %v327
    %v329 = vpop.xlane.xlu0 %328
    %v330 = vadd.f32 %v226, %v227
    %v331 = vadd.f32 %v330, %v228
    %v332 = vadd.f32 %v331, %v229
    %v333 = vadd.f32 %v332, %v230
    %v334 = vadd.f32 %v333, %v231
    %335 = vadd.xlane.f32.xlu0 %v334
    %v336 = vpop.xlane.xlu0 %335
    %v337 = vadd.f32 %v232, %v233
    %v338 = vadd.f32 %v337, %v234
    %v339 = vadd.f32 %v338, %v235
    %v340 = vadd.f32 %v339, %v236
    %v341 = vadd.f32 %v340, %v237
    %342 = vadd.xlane.f32.xlu0 %v341
    %v343 = vpop.xlane.xlu0 %342
    %v344 = vadd.f32 %v238, %v239
    %v345 = vadd.f32 %v344, %v240
    %v346 = vadd.f32 %v345, %v241
    %v347 = vadd.f32 %v346, %v242
    %v348 = vadd.f32 %v347, %v243
    %349 = vadd.xlane.f32.xlu0 %v348
    %v350 = vpop.xlane.xlu0 %349
    %v351 = vadd.f32 %v244, %v245
    %v352 = vadd.f32 %v351, %v246
    %v353 = vadd.f32 %v352, %v247
    %v354 = vadd.f32 %v353, %v248
    %v355 = vadd.f32 %v354, %v249
    %356 = vadd.xlane.f32.xlu0 %v355
    %v357 = vpop.xlane.xlu0 %356
    %v358 = vadd.f32 %v250, %v251
    %v359 = vadd.f32 %v358, %v252
    %v360 = vadd.f32 %v359, %v253
    %v361 = vadd.f32 %v360, %v254
    %v362 = vadd.f32 %v361, %v255
    %363 = vadd.xlane.f32.xlu0 %v362
    %v364 = vpop.xlane.xlu0 %363
    %v365 = vadd.f32 %v256, %v257
    %v366 = vadd.f32 %v365, %v258
    %v367 = vadd.f32 %v366, %v259
    %v368 = vadd.f32 %v367, %v260
    %v369 = vadd.f32 %v368, %v261
    %370 = vadd.xlane.f32.xlu0 %v369
    %v371 = vpop.xlane.xlu0 %370
    %v372 = vadd.f32 %v262, %v263
    %v373 = vadd.f32 %v372, %v264
    %v374 = vadd.f32 %v373, %v265
    %v375 = vadd.f32 %v374, %v266
    %v376 = vadd.f32 %v375, %v267
    %377 = vadd.xlane.f32.xlu0 %v376
    %v378 = vpop.xlane.xlu0 %377
    %v379 = vadd.f32 %v268, %v269
    %v380 = vadd.f32 %v379, %v270
    %v381 = vadd.f32 %v380, %v271
    %v382 = vadd.f32 %v381, %v272
    %v383 = vadd.f32 %v382, %v273
    %384 = vadd.xlane.f32.xlu0 %v383
    %v385 = vpop.xlane.xlu0 %384
    %s386 = smul.u32 0, 128
    %v387 = vlaneseq
    %v388 = vshrl.u32 %v387, 7
    %v389 = vmul.u32 %v388, 128
    %v390 = vstv %s386
    %v391 = vadd.s32 %v390, %v389
    %v392 = vlaneseq
    %v393 = vand.u32 %v392, 127
    %v394 = vadd.s32 %v391, %v393
    %v395 = vstv %s65
    %vm396 = vcmp.lt.s32.totalorder %v394, %v395
    %v397 = vstv %s66
    %vm398 = vcmp.lt.s32.totalorder %v394, %v397
    %vm399 = vmxor %vm396, 1
    %vm400 = vmand %vm399, %vm398
    %v401 = vld [vmem:[#allocation2] sm:$0x1]
    %v418 = vperm.slane %v280, %v393
    %v419 = vadd.s32 %v393, 4294967288
    %v420 = vperm.slane %v287, %v419
    %vm421 = vcmask 130112
    %v422 = vsel %vm421, %v420, %v418
    %v423 = vadd.s32 %v393, 4294967280
    %v424 = vperm.slane %v294, %v423
    %vm425 = vcmask 195712
    %v426 = vsel %vm425, %v424, %v422
    %v427 = vadd.s32 %v393, 4294967272
    %v428 = vperm.slane %v301, %v427
    %vm429 = vcmask 261312
    %v430 = vsel %vm429, %v428, %v426
    %v431 = vadd.s32 %v393, 4294967264
    %v432 = vperm.slane %v308, %v431
    %vm433 = vcmask 326912
    %v434 = vsel %vm433, %v432, %v430
    %v435 = vadd.s32 %v393, 4294967256
    %v436 = vperm.slane %v315, %v435
    %vm437 = vcmask 392512
    %v438 = vsel %vm437, %v436, %v434
    %v439 = vadd.s32 %v393, 4294967248
    %v440 = vperm.slane %v322, %v439
    %vm441 = vcmask 458112
    %v442 = vsel %vm441, %v440, %v438
    %v443 = vadd.s32 %v393, 4294967240
    %v444 = vperm.slane %v329, %v443
    %vm445 = vcmask 523712
    %v446 = vsel %vm445, %v444, %v442
    %v447 = vadd.s32 %v393, 4294967232
    %v448 = vperm.slane %v336, %v447
    %vm449 = vcmask 589312
    %v450 = vsel %vm449, %v448, %v446
    %v451 = vadd.s32 %v393, 4294967224
    %v452 = vperm.slane %v343, %v451
    %vm453 = vcmask 654912
    %v454 = vsel %vm453, %v452, %v450
    %v455 = vadd.s32 %v393, 4294967216
    %v456 = vperm.slane %v350, %v455
    %vm457 = vcmask 720512
    %v458 = vsel %vm457, %v456, %v454
    %v459 = vadd.s32 %v393, 4294967208
    %v460 = vperm.slane %v357, %v459
    %vm461 = vcmask 786112
    %v462 = vsel %vm461, %v460, %v458
    %v463 = vadd.s32 %v393, 4294967200
    %v464 = vperm.slane %v364, %v463
    %vm465 = vcmask 851712
    %v466 = vsel %vm465, %v464, %v462
    %v467 = vadd.s32 %v393, 4294967192
    %v468 = vperm.slane %v371, %v467
    %vm469 = vcmask 917312
    %v470 = vsel %vm469, %v468, %v466
    %v471 = vadd.s32 %v393, 4294967184
    %v472 = vperm.slane %v378, %v471
    %vm473 = vcmask 982912
    %v474 = vsel %vm473, %v472, %v470
    %v475 = vadd.s32 %v393, 4294967176
    %v476 = vperm.slane %v385, %v475
    %vm477 = vcmask 1048512
    %v478 = vsel %vm477, %v476, %v474
    %v480 = vsel %vm396, %v478, -1e+30
    %vm481 = vcmask 1040384
    %v482 = vsel %vm481, %v480, -inf
    %483 = vmax.xlane.f32.xlu0 %v482
    %v484 = vpop.xlane.xlu0 %483
    %v485 = vrot.slane %v484, 4
    %v486 = vmax.f32 %v484, %v485
    %v487 = vrot.slane %v486, 2
    %v488 = vmax.f32 %v486, %v487
    %v489 = vrot.slane %v488, 1
    %v490 = vmax.f32 %v488, %v489
    %s491 = vtos %v490
    %v492 = vstv %s491
    %v493 = vmax.f32 %v401, %v492
    %v494 = vld [vmem:[#allocation5] sm:$0x1]
    %v495 = vsel %vm400, %v478, -1e+30
    %v496 = vsel %vm481, %v495, -inf
    %497 = vmax.xlane.f32.xlu0 %v496
    %v498 = vpop.xlane.xlu0 %497
    %v499 = vrot.slane %v498, 4
    %v500 = vmax.f32 %v498, %v499
    %v501 = vrot.slane %v500, 2
    %v502 = vmax.f32 %v500, %v501
    %v503 = vrot.slane %v502, 1
    %v504 = vmax.f32 %v502, %v503
    %s505 = vtos %v504
    %v506 = vstv %s505
    %v507 = vmax.f32 %v494, %v506
    %509 = vset.pattern.permute.xlu0 0
    %510 = vperm.xlu0 %509, %v493
    %v511 = vpop.permute.xlu0 %510
    %v513 = vperm.slane %v511, 0
    %515 = vset.pattern.permute.xlu0 0
    %516 = vperm.xlu0 %515, %v507
    %v517 = vpop.permute.xlu0 %516
    %v519 = vperm.slane %v517, 0
    %v520 = vsel %vm396, %v513, %v519
    %v522 = vperm.slane %v520, 0
    %v523 = vlaneseq
    %v524 = vshrl.u32 %v523, 7
    %526 = vset.pattern.permute.xlu0 %v524
    %527 = vperm.xlu0 %526, %v522
    %v528 = vpop.permute.xlu0 %527
    %v529 = vlaneseq
    %v530 = vshrl.u32 %v529, 7
    %v531 = vadd.s32 %v530, 8
    %532 = vset.pattern.permute.xlu0 %v531
    %533 = vperm.xlu0 %532, %v522
    %v534 = vpop.permute.xlu0 %533
    %v535 = vlaneseq
    %v536 = vshrl.u32 %v535, 7
    %v537 = vadd.s32 %v536, 16
    %538 = vset.pattern.permute.xlu0 %v537
    %539 = vperm.xlu0 %538, %v522
    %v540 = vpop.permute.xlu0 %539
    %v541 = vlaneseq
    %v542 = vshrl.u32 %v541, 7
    %v543 = vadd.s32 %v542, 24
    %544 = vset.pattern.permute.xlu0 %v543
    %545 = vperm.xlu0 %544, %v522
    %v546 = vpop.permute.xlu0 %545
    %v547 = vlaneseq
    %v548 = vshrl.u32 %v547, 7
    %v549 = vadd.s32 %v548, 32
    %550 = vset.pattern.permute.xlu0 %v549
    %551 = vperm.xlu0 %550, %v522
    %v552 = vpop.permute.xlu0 %551
    %v553 = vlaneseq
    %v554 = vshrl.u32 %v553, 7
    %v555 = vadd.s32 %v554, 40
    %556 = vset.pattern.permute.xlu0 %v555
    %557 = vperm.xlu0 %556, %v522
    %v558 = vpop.permute.xlu0 %557
    %v559 = vlaneseq
    %v560 = vshrl.u32 %v559, 7
    %v561 = vadd.s32 %v560, 48
    %562 = vset.pattern.permute.xlu0 %v561
    %563 = vperm.xlu0 %562, %v522
    %v564 = vpop.permute.xlu0 %563
    %v565 = vlaneseq
    %v566 = vshrl.u32 %v565, 7
    %v567 = vadd.s32 %v566, 56
    %568 = vset.pattern.permute.xlu0 %v567
    %569 = vperm.xlu0 %568, %v522
    %v570 = vpop.permute.xlu0 %569
    %v571 = vlaneseq
    %v572 = vshrl.u32 %v571, 7
    %v573 = vadd.s32 %v572, 64
    %574 = vset.pattern.permute.xlu0 %v573
    %575 = vperm.xlu0 %574, %v522
    %v576 = vpop.permute.xlu0 %575
    %v577 = vlaneseq
    %v578 = vshrl.u32 %v577, 7
    %v579 = vadd.s32 %v578, 72
    %580 = vset.pattern.permute.xlu0 %v579
    %581 = vperm.xlu0 %580, %v522
    %v582 = vpop.permute.xlu0 %581
    %v583 = vlaneseq
    %v584 = vshrl.u32 %v583, 7
    %v585 = vadd.s32 %v584, 80
    %586 = vset.pattern.permute.xlu0 %v585
    %587 = vperm.xlu0 %586, %v522
    %v588 = vpop.permute.xlu0 %587
    %v589 = vlaneseq
    %v590 = vshrl.u32 %v589, 7
    %v591 = vadd.s32 %v590, 88
    %592 = vset.pattern.permute.xlu0 %v591
    %593 = vperm.xlu0 %592, %v522
    %v594 = vpop.permute.xlu0 %593
    %v595 = vlaneseq
    %v596 = vshrl.u32 %v595, 7
    %v597 = vadd.s32 %v596, 96
    %598 = vset.pattern.permute.xlu0 %v597
    %599 = vperm.xlu0 %598, %v522
    %v600 = vpop.permute.xlu0 %599
    %v601 = vlaneseq
    %v602 = vshrl.u32 %v601, 7
    %v603 = vadd.s32 %v602, 104
    %604 = vset.pattern.permute.xlu0 %v603
    %605 = vperm.xlu0 %604, %v522
    %v606 = vpop.permute.xlu0 %605
    %v607 = vlaneseq
    %v608 = vshrl.u32 %v607, 7
    %v609 = vadd.s32 %v608, 112
    %610 = vset.pattern.permute.xlu0 %v609
    %611 = vperm.xlu0 %610, %v522
    %v612 = vpop.permute.xlu0 %611
    %v613 = vlaneseq
    %v614 = vshrl.u32 %v613, 7
    %v615 = vadd.s32 %v614, 120
    %616 = vset.pattern.permute.xlu0 %v615
    %617 = vperm.xlu0 %616, %v522
    %v618 = vpop.permute.xlu0 %617
    %v635 = vsub.f32 %v280, %v528
    %v636 = vsub.f32 %v287, %v534
    %v637 = vsub.f32 %v294, %v540
    %v638 = vsub.f32 %v301, %v546
    %v639 = vsub.f32 %v308, %v552
    %v640 = vsub.f32 %v315, %v558
    %v641 = vsub.f32 %v322, %v564
    %v642 = vsub.f32 %v329, %v570
    %v643 = vsub.f32 %v336, %v576
    %v644 = vsub.f32 %v343, %v582
    %v645 = vsub.f32 %v350, %v588
    %v646 = vsub.f32 %v357, %v594
    %v647 = vsub.f32 %v364, %v600
    %v648 = vsub.f32 %v371, %v606
    %v649 = vsub.f32 %v378, %v612
    %v650 = vsub.f32 %v385, %v618
    %667 = vset.pattern.permute.xlu0 0
    %668 = vperm.xlu0 %667, %v635
    %v669 = vpop.permute.xlu0 %668
    %670 = vset.pattern.permute.xlu0 0
    %671 = vperm.xlu0 %670, %v636
    %v672 = vpop.permute.xlu0 %671
    %673 = vset.pattern.permute.xlu0 0
    %674 = vperm.xlu0 %673, %v637
    %v675 = vpop.permute.xlu0 %674
    %676 = vset.pattern.permute.xlu0 0
    %677 = vperm.xlu0 %676, %v638
    %v678 = vpop.permute.xlu0 %677
    %679 = vset.pattern.permute.xlu0 0
    %680 = vperm.xlu0 %679, %v639
    %v681 = vpop.permute.xlu0 %680
    %682 = vset.pattern.permute.xlu0 0
    %683 = vperm.xlu0 %682, %v640
    %v684 = vpop.permute.xlu0 %683
    %685 = vset.pattern.permute.xlu0 0
    %686 = vperm.xlu0 %685, %v641
    %v687 = vpop.permute.xlu0 %686
    %688 = vset.pattern.permute.xlu0 0
    %689 = vperm.xlu0 %688, %v642
    %v690 = vpop.permute.xlu0 %689
    %691 = vset.pattern.permute.xlu0 0
    %692 = vperm.xlu0 %691, %v643
    %v693 = vpop.permute.xlu0 %692
    %694 = vset.pattern.permute.xlu0 0
    %695 = vperm.xlu0 %694, %v644
    %v696 = vpop.permute.xlu0 %695
    %697 = vset.pattern.permute.xlu0 0
    %698 = vperm.xlu0 %697, %v645
    %v699 = vpop.permute.xlu0 %698
    %700 = vset.pattern.permute.xlu0 0
    %701 = vperm.xlu0 %700, %v646
    %v702 = vpop.permute.xlu0 %701
    %703 = vset.pattern.permute.xlu0 0
    %704 = vperm.xlu0 %703, %v647
    %v705 = vpop.permute.xlu0 %704
    %706 = vset.pattern.permute.xlu0 0
    %707 = vperm.xlu0 %706, %v648
    %v708 = vpop.permute.xlu0 %707
    %709 = vset.pattern.permute.xlu0 0
    %710 = vperm.xlu0 %709, %v649
    %v711 = vpop.permute.xlu0 %710
    %712 = vset.pattern.permute.xlu0 0
    %713 = vperm.xlu0 %712, %v650
    %v714 = vpop.permute.xlu0 %713
    %v715 = vperm.slane %v669, %v393
    %v716 = vperm.slane %v672, %v419
    %v717 = vsel %vm421, %v716, %v715
    %v718 = vperm.slane %v675, %v423
    %v719 = vsel %vm425, %v718, %v717
    %v720 = vperm.slane %v678, %v427
    %v721 = vsel %vm429, %v720, %v719
    %v722 = vperm.slane %v681, %v431
    %v723 = vsel %vm433, %v722, %v721
    %v724 = vperm.slane %v684, %v435
    %v725 = vsel %vm437, %v724, %v723
    %v726 = vperm.slane %v687, %v439
    %v727 = vsel %vm441, %v726, %v725
    %v728 = vperm.slane %v690, %v443
    %v729 = vsel %vm445, %v728, %v727
    %v730 = vperm.slane %v693, %v447
    %v731 = vsel %vm449, %v730, %v729
    %v732 = vperm.slane %v696, %v451
    %v733 = vsel %vm453, %v732, %v731
    %v734 = vperm.slane %v699, %v455
    %v735 = vsel %vm457, %v734, %v733
    %v736 = vperm.slane %v702, %v459
    %v737 = vsel %vm461, %v736, %v735
    %v738 = vperm.slane %v705, %v463
    %v739 = vsel %vm465, %v738, %v737
    %v740 = vperm.slane %v708, %v467
    %v741 = vsel %vm469, %v740, %v739
    %v742 = vperm.slane %v711, %v471
    %v743 = vsel %vm473, %v742, %v741
    %v744 = vperm.slane %v714, %v475
    %v745 = vsel %vm477, %v744, %v743
    %v747 = vsel %vm398, %v745, -1e+30
    %v748 = vmul.f32 %v747, 1.442695
    %v749 = vpow.pop %v748
    %v750 = vsel %vm396, %v749, 0.0
    %v751 = vsel %vm400, %v749, 0.0
    %v752 = vsub.f32 %v401, %v493
    %v753 = vmul.f32 %v752, 1.442695
    %v754 = vpow.pop %v753
    %v755 = vsub.f32 %v494, %v507
    %v756 = vmul.f32 %v755, 1.442695
    %v757 = vpow.pop %v756
    %v758 = vld [vmem:[#allocation3] sm:$0x1]
    %v759 = vmul.f32 %v754, %v758
    %v760 = vsel %vm481, %v750, 0.0
    %761 = vadd.xlane.f32.xlu0 %v760
    %v762 = vpop.xlane.xlu0 %761
    %v763 = vrot.slane %v762, 4
    %v764 = vadd.f32 %v762, %v763
    %v765 = vrot.slane %v764, 2
    %v766 = vadd.f32 %v764, %v765
    %v767 = vrot.slane %v766, 1
    %v768 = vadd.f32 %v766, %v767
    %s769 = vtos %v768
    %v770 = vstv %s769
    %v771 = vadd.f32 %v759, %v770
    %vm772 = vcmask 0
    %773 = vst.msk [vmem:[#allocation3] sm:$0x1] %vm772, %v771
    %v774 = vld [vmem:[#allocation6] sm:$0x1]
    %v775 = vmul.f32 %v757, %v774
    %v776 = vsel %vm481, %v751, 0.0
    %777 = vadd.xlane.f32.xlu0 %v776
    %v778 = vpop.xlane.xlu0 %777
    %v779 = vrot.slane %v778, 4
    %v780 = vadd.f32 %v778, %v779
    %v781 = vrot.slane %v780, 2
    %v782 = vadd.f32 %v780, %v781
    %v783 = vrot.slane %v782, 1
    %v784 = vadd.f32 %v782, %v783
    %s785 = vtos %v784
    %v786 = vstv %s785
    %v787 = vadd.f32 %v775, %v786
    %788 = vst.msk [vmem:[#allocation6] sm:$0x1] %vm772, %v787
    %v789 = vld [vmem:[#allocation4] sm:$0x1]
    %v790 = vmul.f32 %v754, %v789
    %v791 = vmul.f32 %v164, %v750
    %v792 = vsel %vm481, %v791, 0.0
    %793 = vadd.xlane.f32.xlu0 %v792
    %v794 = vpop.xlane.xlu0 %793
    %v795 = vrot.slane %v794, 4
    %v796 = vadd.f32 %v794, %v795
    %v797 = vrot.slane %v796, 2
    %v798 = vadd.f32 %v796, %v797
    %v799 = vrot.slane %v798, 1
    %v800 = vadd.f32 %v798, %v799
    %s801 = vtos %v800
    %v802 = vstv %s801
    %v803 = vadd.f32 %v790, %v802
    %804 = vst.msk [vmem:[#allocation4] sm:$0x1] %vm772, %v803
    %v805 = vld [vmem:[#allocation7] sm:$0x1]
    %v806 = vmul.f32 %v757, %v805
    %v807 = vmul.f32 %v164, %v751
    %v808 = vsel %vm481, %v807, 0.0
    %809 = vadd.xlane.f32.xlu0 %v808
    %v810 = vpop.xlane.xlu0 %809
    %v811 = vrot.slane %v810, 4
    %v812 = vadd.f32 %v810, %v811
    %v813 = vrot.slane %v812, 2
    %v814 = vadd.f32 %v812, %v813
    %v815 = vrot.slane %v814, 1
    %v816 = vadd.f32 %v814, %v815
    %s817 = vtos %v816
    %v818 = vstv %s817
    %v819 = vadd.f32 %v806, %v818
    %820 = vst.msk [vmem:[#allocation7] sm:$0x1] %vm772, %v819
    %821 = vst.msk [vmem:[#allocation2] sm:$0x1] %vm772, %v493
    %822 = vst.msk [vmem:[#allocation5] sm:$0x1] %vm772, %v507
    // Predicated region
    $region26: #{tpu_custom_call.1} parent=1 // pred_check
      %p823 = pneg %p54
    $region27: #{tpu_custom_call.1} parent=1 // pred_check_branch
      %825 = sbr.rel (%p823) target = $region29
    $region28: #{tpu_custom_call.1} parent=1 // pred_region
      %v826 = vld [vmem:[#allocation3] sm:$0x1]
      %vm827 = vcmp.gt.f32.partialorder %v826, 0.0
      %v828 = vld [vmem:[#allocation4] sm:$0x1]
      %v829 = vrcp.pop %v826
      %v830 = vmul.f32 %v826, %v829
      %v831 = vsub.f32 1.0, %v830
      %v832 = vmul.f32 %v829, %v831
      %v833 = vadd.f32 %v829, %v832
      %vm834 = vweird.f32 %v826
      %vm835 = vweird.f32 %v829
      %vm836 = vmor %vm834, %vm835
      %v837 = vsel %vm836, %v829, %v833
      %v838 = vand.u32 2147483647, %v826
      %vm839 = vcmp.eq.f32.partialorder %v838, 8.507059e+37
      %v840 = vand.u32 %v826, 2147483648
      %v841 = vor.u32 1.1754944e-38, %v840
      %v842 = vsel %vm839, %v841, %v837
      %v843 = vmul.f32 %v828, %v842
      %v844 = vsel %vm827, %v843, 0.0
      %v845 = vld [vmem:[#allocation6] sm:$0x1]
      %vm846 = vcmp.gt.f32.partialorder %v845, 0.0
      %v847 = vld [vmem:[#allocation7] sm:$0x1]
      %v848 = vrcp.pop %v845
      %v849 = vmul.f32 %v845, %v848
      %v850 = vsub.f32 1.0, %v849
      %v851 = vmul.f32 %v848, %v850
      %v852 = vadd.f32 %v848, %v851
      %vm853 = vweird.f32 %v845
      %vm854 = vweird.f32 %v848
      %vm855 = vmor %vm853, %vm854
      %v856 = vsel %vm855, %v848, %v852
      %v857 = vand.u32 2147483647, %v845
      %vm858 = vcmp.eq.f32.partialorder %v857, 8.507059e+37
      %v859 = vand.u32 %v845, 2147483648
      %v860 = vor.u32 1.1754944e-38, %v859
      %v861 = vsel %vm858, %v860, %v856
      %v862 = vmul.f32 %v847, %v861
      %v863 = vsel %vm846, %v862, 0.0
      %v864 = vadd.f32 %v844, %v863
      %v865 = vmul.f32 %v864, 0.5
      %866 = vst.msk [vmem:[#allocation15] sm:$0x1] %vm772, %v865
    $region29: #{tpu_custom_call.1} parent=1 // pred_fallthru
      _
    // Predicated region
    $region30: #{tpu_custom_call.1} parent=1 // pred_check
      _
    $region31: #{tpu_custom_call.1} parent=1 // pred_check_branch
      %868 = sbr.rel (0) target = $region33
    $region32: #{tpu_custom_call.1} parent=1 // pred_region
      %870 = vsyncadd [#allocation12], 0
      %s872 = sshll.u32 [#allocation15], 4
      %s873 = int_to_ptr.vmem [resolvable:$true] %s872
      %s874 = sshll.u32 %s4, 4
      %s875 = int_to_ptr.hbm [resolvable:$true] %s874
      %877 = dma.vmem_to_hbm [thread:$0]  %s873, 16, %s875, [#allocation12]
    $region33: #{tpu_custom_call.1} parent=1 // pred_fallthru
      _
    // Predicated region
    $region34: #{tpu_custom_call.1} parent=1 // pred_check
      _
    $region35: #{tpu_custom_call.1} parent=1 // pred_check_branch
      %879 = sbr.rel (0) target = $region37
    $region36: #{tpu_custom_call.1} parent=1 // pred_region
      %881 = dma.done [#allocation12], 16
    $region37: #{tpu_custom_call.1} parent=1 // pred_fallthru
      _
    %882 = vsyncpa [#allocation11], 1
    %883 = vsyncpa [#allocation14], 1
    %884 = vsyncpa [#allocation12], 1

</llo_original>
